<compile_context>
chip_gen: v5e
topology: v5e:2x2
jax: 0.10.0
libtpu: 0.0.40
codegen_flags: <defaults>
</compile_context>

<pallas_src>
import jax
import jax.numpy as jnp
from jax import lax
from jax.experimental import pallas as pl
from jax.experimental.pallas import tpu as pltpu


def _ftgan_kernel(x_ref, wqkv_ref, bqkv_ref, gamma_ref, wa_ref, ba_ref, wc_ref, o_ref):
    B, N, C = x_ref.shape
    Cq = (wqkv_ref.shape[1] - C) // 2

    x = x_ref[...]                        # (B, N, C) token-major
    x2 = x.reshape(B * N, C)              # fold batch into MXU rows (lane dim unchanged)

    # ---- Self_Attn: fused Q/K/V projection (one matmul, one bias add) ----
    qkv = lax.dot_general(x2, wqkv_ref[...], (((1,), (0,)), ((), ())),
                          preferred_element_type=jnp.float32) + bqkv_ref[...]    # (B*N, 2Cq+C)
    q = qkv[:, :Cq].reshape(B, N, Cq)
    k = qkv[:, Cq:2 * Cq].reshape(B, N, Cq)
    v = qkv[:, 2 * Cq:].reshape(B, N, C)

    # energy[b, i, j] = q[b, i] . k[b, j]   (== bmm(proj_query, proj_key))
    energy = jnp.einsum("bnd,bmd->bnm", q, k,
                        preferred_element_type=jnp.float32)                       # (B, N, N)
    m = jnp.max(energy, axis=-1, keepdims=True)
    e = jnp.exp(energy - m)
    attn = e * pl.reciprocal(jnp.sum(e, axis=-1, keepdims=True), approx=True)     # softmax(-1)

    # out[b, i, c] = sum_j attn[b, i, j] * v[b, j, c]   (== bmm(proj_value, attn^T))
    ctx = jnp.einsum("bnm,bmc->bnc", attn, v,
                     preferred_element_type=jnp.float32)                          # (B, N, C)
    sa = gamma_ref[0] * ctx + x                                                   # (B, N, C)

    # ---- local attention pooling, transposed layout: tokens stay on the lane axis ----
    sa2 = sa.reshape(B * N, C)
    h_t = jnp.tanh(lax.dot_general(wa_ref[...], sa2, (((1,), (1,)), ((), ())),
                                   preferred_element_type=jnp.float32)
                   + ba_ref[...])                                                 # (100, B*N)
    s = lax.dot_general(wc_ref[...], h_t, (((1,), (0,)), ((), ())),
                        preferred_element_type=jnp.float32)                       # (1, B*N)

    # per-batch softmax over N tokens (lane reduction), then pooling as an MXU matvec.
    # NOTE: the module pools the ORIGINAL input x (not the attended features sa).
    pooled = []
    for b in range(B):                                                            # B static, unrolled
        s_b = s[:, b * N:(b + 1) * N]                                             # (1, N)
        se = jnp.exp(s_b - jnp.max(s_b, axis=-1, keepdims=True))
        amap = se * pl.reciprocal(jnp.sum(se, axis=-1, keepdims=True), approx=True)
        pooled.append(lax.dot_general(amap, x[b], (((1,), (0,)), ((), ())),
                                      preferred_element_type=jnp.float32))        # (1, C)
    o_ref[...] = jnp.concatenate(pooled, axis=0)                                  # single (B, C) store


def ftgan_local_atten(x, params):
    """x: (B, C, H, W) float32 (NCHW, like the torch module). Returns (B, C)."""
    B, C, H, W = x.shape
    N = H * W
    # NOTE: for large H*W feed NHWC upstream (or fold this relayout into the input
    # BlockSpec/index_map) to avoid an extra HBM round trip; negligible at these shapes.
    x_nc = jnp.transpose(x, (0, 2, 3, 1)).reshape(B, N, C).astype(jnp.float32)

    # Pack Wq | Wk | Wv into a single (C, 2*C//8 + C) weight and one bias row.
    wqkv = jnp.concatenate([params["wq"], params["wk"], params["wv"]], axis=0).T
    bqkv = jnp.concatenate([params["bq"], params["bk"], params["bv"]])[None, :]

    args = (
        x_nc,
        wqkv.astype(jnp.float32),                        # (C, 2*C//8 + C)
        bqkv.astype(jnp.float32),                        # (1, 2*C//8 + C)
        params["gamma"].reshape(1).astype(jnp.float32),  # scalar -> SMEM
        params["wa"].astype(jnp.float32),                # (100, C)
        params["ba"].astype(jnp.float32)[:, None],       # (100, 1)
        params["wc"].astype(jnp.float32),                # (1, 100)
    )

    vmem = pl.BlockSpec(memory_space=pltpu.MemorySpace.VMEM)
    smem = pl.BlockSpec(memory_space=pltpu.MemorySpace.SMEM)

    out = pl.pallas_call(
        _ftgan_kernel,
        out_shape=jax.ShapeDtypeStruct((B, C), jnp.float32),
        in_specs=[vmem, vmem, vmem, smem, vmem, vmem, vmem],
        out_specs=vmem,
    )(*args)
    return out


def reference(x, params):
    """Pure-JAX transcription of the torch forward, for a correctness check."""
    B, C, H, W = x.shape
    N = H * W
    xf = x.reshape(B, C, N)
    q = jnp.einsum("oc,bcn->bno", params["wq"], xf) + params["bq"][None, None, :]
    k = jnp.einsum("oc,bcn->bon", params["wk"], xf) + params["bk"][None, :, None]
    energy = jnp.einsum("bno,bom->bnm", q, k)
    attn = jax.nn.softmax(energy, axis=-1)
    v = jnp.einsum("oc,bcn->bon", params["wv"], xf) + params["bv"][None, :, None]
    out = jnp.einsum("bon,bmn->bom", v, attn)          # proj_value @ attention^T
    out = params["gamma"][0] * out + xf                # (B, C, N)
    h = out.reshape(B, C, H, W).transpose(0, 2, 3, 1).reshape(-1, C)
    h = jnp.tanh(h @ params["wa"].T + params["ba"])
    s = h @ params["wc"].T                             # (B*N, 1)
    amap = jax.nn.softmax(s.reshape(B, N), axis=1).reshape(B, 1, H, W)
    return jnp.sum(x * amap, axis=(2, 3))


if __name__ == "__main__":
    key = jax.random.PRNGKey(0)
    ngf = 8
    C = ngf * 4            # 32 channels (module uses ngf*4)
    B, H, W = 2, 8, 8
    HID = 100              # nn.Linear(ngf*4, 100)

    ks = jax.random.split(key, 10)
    scale = 0.1
    params = {
        "wq": scale * jax.random.normal(ks[0], (C // 8, C), jnp.float32),
        "bq": scale * jax.random.normal(ks[1], (C // 8,), jnp.float32),
        "wk": scale * jax.random.normal(ks[2], (C // 8, C), jnp.float32),
        "bk": scale * jax.random.normal(ks[3], (C // 8,), jnp.float32),
        "wv": scale * jax.random.normal(ks[4], (C, C), jnp.float32),
        "bv": scale * jax.random.normal(ks[5], (C,), jnp.float32),
        # torch init for gamma is zeros; use a nonzero value so the self-attention
        # branch actually contributes in this synthetic run.
        "gamma": jnp.full((1,), 0.5, jnp.float32),
        "wa": scale * jax.random.normal(ks[6], (HID, C), jnp.float32),
        "ba": scale * jax.random.normal(ks[7], (HID,), jnp.float32),
        "wc": scale * jax.random.normal(ks[8], (1, HID), jnp.float32),
    }
    x = jax.random.normal(ks[9], (B, C, H, W), jnp.float32)

    out = jax.block_until_ready(ftgan_local_atten(x, params))
    ref = reference(x, params)
    assert out.shape == (B, C)
    # Tolerance relaxed vs. exact f32: the softmax denominators use the EUP
    # approximate reciprocal (pl.reciprocal(..., approx=True)).
    assert jnp.allclose(out, ref, atol=5e-3, rtol=5e-3), float(jnp.max(jnp.abs(out - ref)))
    print("KERNEL_OK")
</pallas_src>

<mosaic_0001>
module attributes {stable_mosaic.version = 11 : i64} {
  func.func @_ftgan_kernel(%arg0: memref<2x64x32xf32, #tpu.memory_space<vmem>>, %arg1: memref<32x40xf32, #tpu.memory_space<vmem>>, %arg2: memref<1x40xf32, #tpu.memory_space<vmem>>, %arg3: memref<1xf32, #tpu.memory_space<smem>>, %arg4: memref<100x32xf32, #tpu.memory_space<vmem>>, %arg5: memref<100x1xf32, #tpu.memory_space<vmem>>, %arg6: memref<1x100xf32, #tpu.memory_space<vmem>>, %arg7: memref<2x32xf32, #tpu.memory_space<vmem>>) attributes {dimension_semantics = [], scalar_prefetch = 0 : i64, scratch_operands = 0 : i64, tpu.core_type = #tpu.core_type<tc>} {
    %c0 = arith.constant 0 : index
    %c0_0 = arith.constant 0 : index
    %c0_1 = arith.constant 0 : index
    %0 = vector.load %arg0[%c0, %c0_0, %c0_1] : memref<2x64x32xf32, #tpu.memory_space<vmem>>, vector<2x64x32xf32>
    %1 = vector.shape_cast %0 : vector<2x64x32xf32> to vector<128x32xf32>
    %c0_2 = arith.constant 0 : index
    %c0_3 = arith.constant 0 : index
    %2 = vector.load %arg1[%c0_2, %c0_3] : memref<32x40xf32, #tpu.memory_space<vmem>>, vector<32x40xf32>
    %cst = arith.constant dense<0.000000e+00> : vector<128x40xf32>
    %3 = tpu.matmul %1, %2, %cst {dimension_numbers = #tpu.dot_dimension_numbers<[1], [0], [0], [1], [0, 0, 1, 1], [], []>} : vector<128x32xf32>, vector<32x40xf32>, vector<128x40xf32> -> vector<128x40xf32>
    %c0_4 = arith.constant 0 : index
    %c0_5 = arith.constant 0 : index
    %4 = vector.load %arg2[%c0_4, %c0_5] : memref<1x40xf32, #tpu.memory_space<vmem>>, vector<1x40xf32>
    %5 = vector.broadcast %4 : vector<1x40xf32> to vector<128x40xf32>
    %6 = arith.addf %3, %5 : vector<128x40xf32>
    %7 = vector.extract_strided_slice %6 {offsets = [0, 0], sizes = [128, 4], strides = [1, 1]} : vector<128x40xf32> to vector<128x4xf32>
    %8 = vector.shape_cast %7 : vector<128x4xf32> to vector<2x64x4xf32>
    %9 = vector.extract_strided_slice %6 {offsets = [0, 4], sizes = [128, 4], strides = [1, 1]} : vector<128x40xf32> to vector<128x4xf32>
    %10 = vector.shape_cast %9 : vector<128x4xf32> to vector<2x64x4xf32>
    %11 = vector.extract_strided_slice %6 {offsets = [0, 8], sizes = [128, 32], strides = [1, 1]} : vector<128x40xf32> to vector<128x32xf32>
    %12 = vector.shape_cast %11 : vector<128x32xf32> to vector<2x64x32xf32>
    "tpu.trace_start"() <{level = 10 : i32, message = "bnd,bmd->bnm"}> : () -> ()
    %cst_6 = arith.constant dense<0.000000e+00> : vector<2x64x64xf32>
    %13 = tpu.matmul %8, %10, %cst_6 {dimension_numbers = #tpu.dot_dimension_numbers<[2], [2], [1], [1], [0, 0, 0, 1, 1, 1], [0], [0]>} : vector<2x64x4xf32>, vector<2x64x4xf32>, vector<2x64x64xf32> -> vector<2x64x64xf32>
    "tpu.trace_stop"() : () -> ()
    %cst_7 = arith.constant dense<0xFF800000> : vector<2x64xf32>
    %14 = vector.multi_reduction <maximumf>, %13, %cst_7 [2] : vector<2x64x64xf32> to vector<2x64xf32>
    %15 = vector.shape_cast %14 : vector<2x64xf32> to vector<2x64x1xf32>
    %16 = vector.broadcast %15 : vector<2x64x1xf32> to vector<2x64x64xf32>
    %17 = arith.subf %13, %16 : vector<2x64x64xf32>
    %18 = math.exp %17 : vector<2x64x64xf32>
    %cst_8 = arith.constant dense<0.000000e+00> : vector<2x64xf32>
    %19 = vector.multi_reduction <add>, %18, %cst_8 [2] : vector<2x64x64xf32> to vector<2x64xf32>
    %20 = vector.shape_cast %19 : vector<2x64xf32> to vector<2x64x1xf32>
    %21 = tpu.reciprocal %20 {approx = true} : vector<2x64x1xf32> -> vector<2x64x1xf32>
    %22 = vector.broadcast %21 : vector<2x64x1xf32> to vector<2x64x64xf32>
    %23 = arith.mulf %18, %22 : vector<2x64x64xf32>
    "tpu.trace_start"() <{level = 10 : i32, message = "bnm,bmc->bnc"}> : () -> ()
    %cst_9 = arith.constant dense<0.000000e+00> : vector<2x64x32xf32>
    %24 = tpu.matmul %23, %12, %cst_9 {dimension_numbers = #tpu.dot_dimension_numbers<[2], [1], [1], [2], [0, 0, 0, 1, 1, 2], [0], [0]>} : vector<2x64x64xf32>, vector<2x64x32xf32>, vector<2x64x32xf32> -> vector<2x64x32xf32>
    "tpu.trace_stop"() : () -> ()
    %c0_10 = arith.constant 0 : index
    %25 = memref.load %arg3[%c0_10] : memref<1xf32, #tpu.memory_space<smem>>
    %26 = vector.broadcast %25 : f32 to vector<2x64x32xf32>
    %27 = arith.mulf %26, %24 : vector<2x64x32xf32>
    %28 = arith.addf %27, %0 : vector<2x64x32xf32>
    %29 = vector.shape_cast %28 : vector<2x64x32xf32> to vector<128x32xf32>
    %c0_11 = arith.constant 0 : index
    %c0_12 = arith.constant 0 : index
    %30 = vector.load %arg4[%c0_11, %c0_12] : memref<100x32xf32, #tpu.memory_space<vmem>>, vector<100x32xf32>
    %cst_13 = arith.constant dense<0.000000e+00> : vector<100x128xf32>
    %31 = tpu.matmul %30, %29, %cst_13 {dimension_numbers = #tpu.dot_dimension_numbers<[1], [1], [0], [0], [0, 0, 1, 0], [], []>} : vector<100x32xf32>, vector<128x32xf32>, vector<100x128xf32> -> vector<100x128xf32>
    %c0_14 = arith.constant 0 : index
    %c0_15 = arith.constant 0 : index
    %32 = vector.load %arg5[%c0_14, %c0_15] : memref<100x1xf32, #tpu.memory_space<vmem>>, vector<100x1xf32>
    %33 = vector.broadcast %32 : vector<100x1xf32> to vector<100x128xf32>
    %34 = arith.addf %31, %33 : vector<100x128xf32>
    %35 = math.tanh %34 : vector<100x128xf32>
    %c0_16 = arith.constant 0 : index
    %c0_17 = arith.constant 0 : index
    %36 = vector.load %arg6[%c0_16, %c0_17] : memref<1x100xf32, #tpu.memory_space<vmem>>, vector<1x100xf32>
    %cst_18 = arith.constant dense<0.000000e+00> : vector<1x128xf32>
    %37 = tpu.matmul %36, %35, %cst_18 {dimension_numbers = #tpu.dot_dimension_numbers<[1], [0], [0], [1], [0, 0, 1, 1], [], []>} : vector<1x100xf32>, vector<100x128xf32>, vector<1x128xf32> -> vector<1x128xf32>
    %38 = vector.extract_strided_slice %37 {offsets = [0, 0], sizes = [1, 64], strides = [1, 1]} : vector<1x128xf32> to vector<1x64xf32>
    %cst_19 = arith.constant dense<0xFF800000> : vector<1xf32>
    %39 = vector.multi_reduction <maximumf>, %38, %cst_19 [1] : vector<1x64xf32> to vector<1xf32>
    %40 = vector.shape_cast %39 : vector<1xf32> to vector<1x1xf32>
    %41 = vector.broadcast %40 : vector<1x1xf32> to vector<1x64xf32>
    %42 = arith.subf %38, %41 : vector<1x64xf32>
    %43 = math.exp %42 : vector<1x64xf32>
    %cst_20 = arith.constant dense<0.000000e+00> : vector<1xf32>
    %44 = vector.multi_reduction <add>, %43, %cst_20 [1] : vector<1x64xf32> to vector<1xf32>
    %45 = vector.shape_cast %44 : vector<1xf32> to vector<1x1xf32>
    %46 = tpu.reciprocal %45 {approx = true} : vector<1x1xf32> -> vector<1x1xf32>
    %47 = vector.broadcast %46 : vector<1x1xf32> to vector<1x64xf32>
    %48 = arith.mulf %43, %47 : vector<1x64xf32>
    %49 = vector.extract_strided_slice %0 {offsets = [0, 0, 0], sizes = [1, 64, 32], strides = [1, 1, 1]} : vector<2x64x32xf32> to vector<1x64x32xf32>
    %50 = vector.shape_cast %49 : vector<1x64x32xf32> to vector<64x32xf32>
    %cst_21 = arith.constant dense<0.000000e+00> : vector<1x32xf32>
    %51 = tpu.matmul %48, %50, %cst_21 {dimension_numbers = #tpu.dot_dimension_numbers<[1], [0], [0], [1], [0, 0, 1, 1], [], []>} : vector<1x64xf32>, vector<64x32xf32>, vector<1x32xf32> -> vector<1x32xf32>
    %52 = vector.extract_strided_slice %37 {offsets = [0, 64], sizes = [1, 64], strides = [1, 1]} : vector<1x128xf32> to vector<1x64xf32>
    %cst_22 = arith.constant dense<0xFF800000> : vector<1xf32>
    %53 = vector.multi_reduction <maximumf>, %52, %cst_22 [1] : vector<1x64xf32> to vector<1xf32>
    %54 = vector.shape_cast %53 : vector<1xf32> to vector<1x1xf32>
    %55 = vector.broadcast %54 : vector<1x1xf32> to vector<1x64xf32>
    %56 = arith.subf %52, %55 : vector<1x64xf32>
    %57 = math.exp %56 : vector<1x64xf32>
    %cst_23 = arith.constant dense<0.000000e+00> : vector<1xf32>
    %58 = vector.multi_reduction <add>, %57, %cst_23 [1] : vector<1x64xf32> to vector<1xf32>
    %59 = vector.shape_cast %58 : vector<1xf32> to vector<1x1xf32>
    %60 = tpu.reciprocal %59 {approx = true} : vector<1x1xf32> -> vector<1x1xf32>
    %61 = vector.broadcast %60 : vector<1x1xf32> to vector<1x64xf32>
    %62 = arith.mulf %57, %61 : vector<1x64xf32>
    %63 = vector.extract_strided_slice %0 {offsets = [1, 0, 0], sizes = [1, 64, 32], strides = [1, 1, 1]} : vector<2x64x32xf32> to vector<1x64x32xf32>
    %64 = vector.shape_cast %63 : vector<1x64x32xf32> to vector<64x32xf32>
    %cst_24 = arith.constant dense<0.000000e+00> : vector<1x32xf32>
    %65 = tpu.matmul %62, %64, %cst_24 {dimension_numbers = #tpu.dot_dimension_numbers<[1], [0], [0], [1], [0, 0, 1, 1], [], []>} : vector<1x64xf32>, vector<64x32xf32>, vector<1x32xf32> -> vector<1x32xf32>
    %66 = tpu.concatenate %51, %65 in 0 : vector<1x32xf32>, vector<1x32xf32> -> vector<2x32xf32>
    %c0_25 = arith.constant 0 : index
    %c0_26 = arith.constant 0 : index
    %67 = vector.load %arg7[%c0_25, %c0_26] : memref<2x32xf32, #tpu.memory_space<vmem>>, vector<2x32xf32>
    tpu.vector_store %arg7[%c0_25, %c0_26], %66 {strides = array<i32>} : memref<2x32xf32, #tpu.memory_space<vmem>>, vector<2x32xf32>,
    return
  }
}

</mosaic_0001>

<llo_original>
// kernel: tpu_custom_call.1
$region0: #{tpu_custom_call.1}
  #allocation0 [shape = 'u32[]', space=smem, size = 0x4, offset = 0x4, fixed_abs, tag = 'smem constant byte address 0x4 - core index']
  #allocation1 [shape = 'u32[72,128]{1,0:T(1,128)}', space=vmem, size = 0x9000, scoped, tag = 'internal scratch']
  #allocation2 [shape = 'f32[1]{0:T(128)S(6)}', space=smem, size = 0x200, scoped, tag = 'scoped memory for tpu_custom_call.1']
  %s0 = inlined_call_operand.vmem [shape: f32[2,64,32], index: 0, kind: input, shape index: {}]
  %s1 = inlined_call_operand.vmem [shape: f32[32,40], index: 1, kind: input, shape index: {}]
  %s2 = inlined_call_operand.vmem [shape: f32[1,40], index: 2, kind: input, shape index: {}]
  %s3 = inlined_call_operand.<no memory space> [shape: f32[1], index: 3, kind: input, shape index: {}]
  %s4 = inlined_call_operand.vmem [shape: f32[100,32], index: 4, kind: input, shape index: {}]
  %s5 = inlined_call_operand.vmem [shape: f32[100,1], index: 5, kind: input, shape index: {}]
  %s6 = inlined_call_operand.vmem [shape: f32[1,100], index: 6, kind: input, shape index: {}]
  %s7 = inlined_call_operand.hbm [shape: f32[2,32], index: 7, kind: output, shape index: {}]
  %s8 = sld [smem:[#allocation0]]
  $region38: #{tpu_custom_call.1} parent=0
    _
  %s10 = ssub.s32 1, %s8
  %s11 = scalar_select 0, %s10, %s8
  %12 = sst [smem:[#allocation2]] %s3
  $region1: #{tpu_custom_call.1} parent=0
    #allocation3 [shape = 'u8[1024]{0}', space=vmem, size = 0x400, scoped, tag = 'output window, operand 0, single buffered']
    #allocation4 [shape = 's32[1]{0}', space=sflag, size = 0x4, scoped, tag = 'scoped memory for tpu_custom_call.1']
    %13 = vsyncpa [#allocation4], 0
    // Predicated region
    $region2: #{tpu_custom_call.1} parent=1 // pred_check
      _
    $region3: #{tpu_custom_call.1} parent=1 // pred_check_branch
      %15 = sbr.rel (0) target = $region5
    $region4: #{tpu_custom_call.1} parent=1 // pred_region
      _
    $region5: #{tpu_custom_call.1} parent=1 // pred_fallthru
      _
    // Predicated region
    $region6: #{tpu_custom_call.1} parent=1 // pred_check
      _
    $region7: #{tpu_custom_call.1} parent=1 // pred_check_branch
      %17 = sbr.rel (0) target = $region9
    $region8: #{tpu_custom_call.1} parent=1 // pred_region
      _
    $region9: #{tpu_custom_call.1} parent=1 // pred_fallthru
      _
    // Predicated region
    $region10: #{tpu_custom_call.1} parent=1 // pred_check
      _
    $region11: #{tpu_custom_call.1} parent=1 // pred_check_branch
      %19 = sbr.rel (0) target = $region13
    $region12: #{tpu_custom_call.1} parent=1 // pred_region
      _
    $region13: #{tpu_custom_call.1} parent=1 // pred_fallthru
      _
    // Predicated region
    $region14: #{tpu_custom_call.1} parent=1 // pred_check
      _
    $region15: #{tpu_custom_call.1} parent=1 // pred_check_branch
      %21 = sbr.rel (0) target = $region17
    $region16: #{tpu_custom_call.1} parent=1 // pred_region
      _
    $region17: #{tpu_custom_call.1} parent=1 // pred_fallthru
      _
    // Predicated region
    $region18: #{tpu_custom_call.1} parent=1 // pred_check
      _
    $region19: #{tpu_custom_call.1} parent=1 // pred_check_branch
      %23 = sbr.rel (0) target = $region21
    $region20: #{tpu_custom_call.1} parent=1 // pred_region
      _
    $region21: #{tpu_custom_call.1} parent=1 // pred_fallthru
      _
    // Predicated region
    $region22: #{tpu_custom_call.1} parent=1 // pred_check
      _
    $region23: #{tpu_custom_call.1} parent=1 // pred_check_branch
      %25 = sbr.rel (0) target = $region25
    $region24: #{tpu_custom_call.1} parent=1 // pred_region
      _
    $region25: #{tpu_custom_call.1} parent=1 // pred_fallthru
      _
    // Predicated region
    $region26: #{tpu_custom_call.1} parent=1 // pred_check
      _
    $region27: #{tpu_custom_call.1} parent=1 // pred_check_branch
      %27 = sbr.rel (0) target = $region29
    $region28: #{tpu_custom_call.1} parent=1 // pred_region
      _
    $region29: #{tpu_custom_call.1} parent=1 // pred_fallthru
      _
    %v28 = vld [vmem:[%s0] sm:$0xff]
    %v29 = vld [vmem:[%s0 + $0x8] sm:$0xff]
    %v30 = vld [vmem:[%s0 + $0x10] sm:$0xff]
    %v31 = vld [vmem:[%s0 + $0x18] sm:$0xff]
    %v32 = vld [vmem:[%s0 + $0x20] sm:$0xff]
    %v33 = vld [vmem:[%s0 + $0x28] sm:$0xff]
    %v34 = vld [vmem:[%s0 + $0x30] sm:$0xff]
    %v35 = vld [vmem:[%s0 + $0x38] sm:$0xff]
    %v36 = vld [vmem:[%s0 + $0x40] sm:$0xff]
    %v37 = vld [vmem:[%s0 + $0x48] sm:$0xff]
    %v38 = vld [vmem:[%s0 + $0x50] sm:$0xff]
    %v39 = vld [vmem:[%s0 + $0x58] sm:$0xff]
    %v40 = vld [vmem:[%s0 + $0x60] sm:$0xff]
    %v41 = vld [vmem:[%s0 + $0x68] sm:$0xff]
    %v42 = vld [vmem:[%s0 + $0x70] sm:$0xff]
    %v43 = vld [vmem:[%s0 + $0x78] sm:$0xff]
    %v44 = vld [vmem:[%s1] sm:$0xff]
    %v45 = vld [vmem:[%s1 + $0x8] sm:$0xff]
    %v46 = vld [vmem:[%s1 + $0x10] sm:$0xff]
    %v47 = vld [vmem:[%s1 + $0x18] sm:$0xff]
    %v48 = vld [vmem:[%s2] sm:$0x1]
    %v50 = vperm.slane %v48, 0
    %vm52 = vcmask 261120
    %v54 = vsel %vm52, %v28, 0
    %v57 = vsel %vm52, %v29, 0
    %v60 = vsel %vm52, %v30, 0
    %v63 = vsel %vm52, %v31, 0
    %v66 = vsel %vm52, %v32, 0
    %v69 = vsel %vm52, %v33, 0
    %v72 = vsel %vm52, %v34, 0
    %v75 = vsel %vm52, %v35, 0
    %v78 = vsel %vm52, %v36, 0
    %v81 = vsel %vm52, %v37, 0
    %v84 = vsel %vm52, %v38, 0
    %v87 = vsel %vm52, %v39, 0
    %v90 = vsel %vm52, %v40, 0
    %v93 = vsel %vm52, %v41, 0
    %v96 = vsel %vm52, %v42, 0
    %v99 = vsel %vm52, %v43, 0
    %101 = vmatpush.msra.mxu0 0.0
    %102 = vmatpush.msra.mxu0 0.0
    %103 = vmatpush.msra.mxu0 0.0
    %104 = vmatpush.msra.mxu0 0.0
    %105 = vmatpush.msra.mxu0 0.0
    %106 = vmatpush.msra.mxu0 0.0
    %107 = vmatpush.msra.mxu0 0.0
    %108 = vmatpush.msra.mxu0 0.0
    %109 = vmatpush.msra.mxu0 0.0
    %110 = vmatpush.msra.mxu0 0.0
    %111 = vmatpush.msra.mxu0 0.0
    %112 = vmatpush.msra.mxu0 0.0
    %113 = vmatpush.msra.mxu0 %v47
    %114 = vmatpush.msra.mxu0 %v46
    %115 = vmatpush.msra.mxu0 %v45
    %116 = vmatpush.msra.mxu0 %v44
    %117 = vmatmul.f32.gmra.mxu0 %v54
    %v118 = vpop.f32.mrf.mxu0
    %v119 = vadd.f32 %v50, %v118
    %120 = vmatmul.f32.gmra.mxu0 %v57
    %v121 = vpop.f32.mrf.mxu0
    %v122 = vadd.f32 %v50, %v121
    %123 = vmatmul.f32.gmra.mxu0 %v60
    %v124 = vpop.f32.mrf.mxu0
    %v125 = vadd.f32 %v50, %v124
    %126 = vmatmul.f32.gmra.mxu0 %v63
    %v127 = vpop.f32.mrf.mxu0
    %v128 = vadd.f32 %v50, %v127
    %129 = vmatmul.f32.gmra.mxu0 %v66
    %v130 = vpop.f32.mrf.mxu0
    %v131 = vadd.f32 %v50, %v130
    %132 = vmatmul.f32.gmra.mxu0 %v69
    %v133 = vpop.f32.mrf.mxu0
    %v134 = vadd.f32 %v50, %v133
    %135 = vmatmul.f32.gmra.mxu0 %v72
    %v136 = vpop.f32.mrf.mxu0
    %v137 = vadd.f32 %v50, %v136
    %138 = vmatmul.f32.gmra.mxu0 %v75
    %v139 = vpop.f32.mrf.mxu0
    %v140 = vadd.f32 %v50, %v139
    %141 = vmatmul.f32.gmra.mxu0 %v78
    %v142 = vpop.f32.mrf.mxu0
    %v143 = vadd.f32 %v50, %v142
    %144 = vmatmul.f32.gmra.mxu0 %v81
    %v145 = vpop.f32.mrf.mxu0
    %v146 = vadd.f32 %v50, %v145
    %147 = vmatmul.f32.gmra.mxu0 %v84
    %v148 = vpop.f32.mrf.mxu0
    %v149 = vadd.f32 %v50, %v148
    %150 = vmatmul.f32.gmra.mxu0 %v87
    %v151 = vpop.f32.mrf.mxu0
    %v152 = vadd.f32 %v50, %v151
    %153 = vmatmul.f32.gmra.mxu0 %v90
    %v154 = vpop.f32.mrf.mxu0
    %v155 = vadd.f32 %v50, %v154
    %156 = vmatmul.f32.gmra.mxu0 %v93
    %v157 = vpop.f32.mrf.mxu0
    %v158 = vadd.f32 %v50, %v157
    %159 = vmatmul.f32.gmra.mxu0 %v96
    %v160 = vpop.f32.mrf.mxu0
    %v161 = vadd.f32 %v50, %v160
    %162 = vmatmul.f32.gmra.mxu0 %v99
    %v163 = vpop.f32.mrf.mxu0
    %v164 = vadd.f32 %v50, %v163
    %165 = vdwg.mxu0
    %174 = vrot.lane.b32.xlu0 %v119, 124
    %v175 = vpop.permute.xlu0 %174
    %176 = vrot.lane.b32.xlu0 %v122, 124
    %v177 = vpop.permute.xlu0 %176
    %178 = vrot.lane.b32.xlu0 %v125, 124
    %v179 = vpop.permute.xlu0 %178
    %180 = vrot.lane.b32.xlu0 %v128, 124
    %v181 = vpop.permute.xlu0 %180
    %182 = vrot.lane.b32.xlu0 %v131, 124
    %v183 = vpop.permute.xlu0 %182
    %184 = vrot.lane.b32.xlu0 %v134, 124
    %v185 = vpop.permute.xlu0 %184
    %186 = vrot.lane.b32.xlu0 %v137, 124
    %v187 = vpop.permute.xlu0 %186
    %188 = vrot.lane.b32.xlu0 %v140, 124
    %v189 = vpop.permute.xlu0 %188
    %vm190 = vcmask 31744
    %v191 = vsel %vm190, %v119, 0
    %v193 = vsel %vm190, %v122, 0
    %v195 = vsel %vm190, %v125, 0
    %v197 = vsel %vm190, %v128, 0
    %v199 = vsel %vm190, %v131, 0
    %v201 = vsel %vm190, %v134, 0
    %v203 = vsel %vm190, %v137, 0
    %v205 = vsel %vm190, %v140, 0
    %v207 = vsel %vm190, %v175, 0
    %v209 = vsel %vm190, %v177, 0
    %v211 = vsel %vm190, %v179, 0
    %v213 = vsel %vm190, %v181, 0
    %v215 = vsel %vm190, %v183, 0
    %v217 = vsel %vm190, %v185, 0
    %v219 = vsel %vm190, %v187, 0
    %v221 = vsel %vm190, %v189, 0
    %223 = vmatpush.xpose.msra.mxu0 0.0
    %224 = vmatpush.xpose.msra.mxu0 0.0
    %225 = vmatpush.xpose.msra.mxu0 0.0
    %226 = vmatpush.xpose.msra.mxu0 0.0
    %227 = vmatpush.xpose.msra.mxu0 0.0
    %228 = vmatpush.xpose.msra.mxu0 0.0
    %229 = vmatpush.xpose.msra.mxu0 0.0
    %230 = vmatpush.xpose.msra.mxu0 0.0
    %231 = vmatpush.xpose.msra.mxu0 %v221
    %232 = vmatpush.xpose.msra.mxu0 %v219
    %233 = vmatpush.xpose.msra.mxu0 %v217
    %234 = vmatpush.xpose.msra.mxu0 %v215
    %235 = vmatpush.xpose.msra.mxu0 %v213
    %236 = vmatpush.xpose.msra.mxu0 %v211
    %237 = vmatpush.xpose.msra.mxu0 %v209
    %238 = vmatpush.xpose.msra.mxu0 %v207
    %239 = vmatmul.f32.gmra.mxu0 %v191
    %v240 = vpop.f32.mrf.mxu0
    %v241 = vadd.f32 0.0, %v240
    %242 = vmatmul.f32.gmra.mxu0 %v193
    %v243 = vpop.f32.mrf.mxu0
    %v244 = vadd.f32 0.0, %v243
    %245 = vmatmul.f32.gmra.mxu0 %v195
    %v246 = vpop.f32.mrf.mxu0
    %v247 = vadd.f32 0.0, %v246
    %248 = vmatmul.f32.gmra.mxu0 %v197
    %v249 = vpop.f32.mrf.mxu0
    %v250 = vadd.f32 0.0, %v249
    %251 = vmatmul.f32.gmra.mxu0 %v199
    %v252 = vpop.f32.mrf.mxu0
    %v253 = vadd.f32 0.0, %v252
    %254 = vmatmul.f32.gmra.mxu0 %v201
    %v255 = vpop.f32.mrf.mxu0
    %v256 = vadd.f32 0.0, %v255
    %257 = vmatmul.f32.gmra.mxu0 %v203
    %v258 = vpop.f32.mrf.mxu0
    %v259 = vadd.f32 0.0, %v258
    %260 = vmatmul.f32.gmra.mxu0 %v205
    %v261 = vpop.f32.mrf.mxu0
    %v262 = vadd.f32 0.0, %v261
    %263 = vdwg.mxu0
    %272 = vrot.lane.b32.xlu0 %v143, 124
    %v273 = vpop.permute.xlu0 %272
    %274 = vrot.lane.b32.xlu0 %v146, 124
    %v275 = vpop.permute.xlu0 %274
    %276 = vrot.lane.b32.xlu0 %v149, 124
    %v277 = vpop.permute.xlu0 %276
    %278 = vrot.lane.b32.xlu0 %v152, 124
    %v279 = vpop.permute.xlu0 %278
    %280 = vrot.lane.b32.xlu0 %v155, 124
    %v281 = vpop.permute.xlu0 %280
    %282 = vrot.lane.b32.xlu0 %v158, 124
    %v283 = vpop.permute.xlu0 %282
    %284 = vrot.lane.b32.xlu0 %v161, 124
    %v285 = vpop.permute.xlu0 %284
    %286 = vrot.lane.b32.xlu0 %v164, 124
    %v287 = vpop.permute.xlu0 %286
    %v288 = vsel %vm190, %v143, 0
    %v290 = vsel %vm190, %v146, 0
    %v292 = vsel %vm190, %v149, 0
    %v294 = vsel %vm190, %v152, 0
    %v296 = vsel %vm190, %v155, 0
    %v298 = vsel %vm190, %v158, 0
    %v300 = vsel %vm190, %v161, 0
    %v302 = vsel %vm190, %v164, 0
    %v304 = vsel %vm190, %v273, 0
    %v306 = vsel %vm190, %v275, 0
    %v308 = vsel %vm190, %v277, 0
    %v310 = vsel %vm190, %v279, 0
    %v312 = vsel %vm190, %v281, 0
    %v314 = vsel %vm190, %v283, 0
    %v316 = vsel %vm190, %v285, 0
    %v318 = vsel %vm190, %v287, 0
    %320 = vmatpush.xpose.msra.mxu0 0.0
    %321 = vmatpush.xpose.msra.mxu0 0.0
    %322 = vmatpush.xpose.msra.mxu0 0.0
    %323 = vmatpush.xpose.msra.mxu0 0.0
    %324 = vmatpush.xpose.msra.mxu0 0.0
    %325 = vmatpush.xpose.msra.mxu0 0.0
    %326 = vmatpush.xpose.msra.mxu0 0.0
    %327 = vmatpush.xpose.msra.mxu0 0.0
    %328 = vmatpush.xpose.msra.mxu0 %v318
    %329 = vmatpush.xpose.msra.mxu0 %v316
    %330 = vmatpush.xpose.msra.mxu0 %v314
    %331 = vmatpush.xpose.msra.mxu0 %v312
    %332 = vmatpush.xpose.msra.mxu0 %v310
    %333 = vmatpush.xpose.msra.mxu0 %v308
    %334 = vmatpush.xpose.msra.mxu0 %v306
    %335 = vmatpush.xpose.msra.mxu0 %v304
    %336 = vmatmul.f32.gmra.mxu0 %v288
    %v337 = vpop.f32.mrf.mxu0
    %v338 = vadd.f32 0.0, %v337
    %339 = vmatmul.f32.gmra.mxu0 %v290
    %v340 = vpop.f32.mrf.mxu0
    %v341 = vadd.f32 0.0, %v340
    %342 = vmatmul.f32.gmra.mxu0 %v292
    %v343 = vpop.f32.mrf.mxu0
    %v344 = vadd.f32 0.0, %v343
    %345 = vmatmul.f32.gmra.mxu0 %v294
    %v346 = vpop.f32.mrf.mxu0
    %v347 = vadd.f32 0.0, %v346
    %348 = vmatmul.f32.gmra.mxu0 %v296
    %v349 = vpop.f32.mrf.mxu0
    %v350 = vadd.f32 0.0, %v349
    %351 = vmatmul.f32.gmra.mxu0 %v298
    %v352 = vpop.f32.mrf.mxu0
    %v353 = vadd.f32 0.0, %v352
    %354 = vmatmul.f32.gmra.mxu0 %v300
    %v355 = vpop.f32.mrf.mxu0
    %v356 = vadd.f32 0.0, %v355
    %357 = vmatmul.f32.gmra.mxu0 %v302
    %v358 = vpop.f32.mrf.mxu0
    %v359 = vadd.f32 0.0, %v358
    %360 = vdwg.mxu0
    %vm361 = vcmask 523264
    %v362 = vsel %vm361, %v241, -inf
    %363 = vmax.xlane.f32.xlu0 %v362
    %v364 = vpop.xlane.xlu0 %363
    %v365 = vsel %vm361, %v244, -inf
    %366 = vmax.xlane.f32.xlu0 %v365
    %v367 = vpop.xlane.xlu0 %366
    %v368 = vsel %vm361, %v247, -inf
    %369 = vmax.xlane.f32.xlu0 %v368
    %v370 = vpop.xlane.xlu0 %369
    %v371 = vsel %vm361, %v250, -inf
    %372 = vmax.xlane.f32.xlu0 %v371
    %v373 = vpop.xlane.xlu0 %372
    %v374 = vsel %vm361, %v253, -inf
    %375 = vmax.xlane.f32.xlu0 %v374
    %v376 = vpop.xlane.xlu0 %375
    %v377 = vsel %vm361, %v256, -inf
    %378 = vmax.xlane.f32.xlu0 %v377
    %v379 = vpop.xlane.xlu0 %378
    %v380 = vsel %vm361, %v259, -inf
    %381 = vmax.xlane.f32.xlu0 %v380
    %v382 = vpop.xlane.xlu0 %381
    %v383 = vsel %vm361, %v262, -inf
    %384 = vmax.xlane.f32.xlu0 %v383
    %v385 = vpop.xlane.xlu0 %384
    %v386 = vsel %vm361, %v338, -inf
    %387 = vmax.xlane.f32.xlu0 %v386
    %v388 = vpop.xlane.xlu0 %387
    %v389 = vsel %vm361, %v341, -inf
    %390 = vmax.xlane.f32.xlu0 %v389
    %v391 = vpop.xlane.xlu0 %390
    %v392 = vsel %vm361, %v344, -inf
    %393 = vmax.xlane.f32.xlu0 %v392
    %v394 = vpop.xlane.xlu0 %393
    %v395 = vsel %vm361, %v347, -inf
    %396 = vmax.xlane.f32.xlu0 %v395
    %v397 = vpop.xlane.xlu0 %396
    %v398 = vsel %vm361, %v350, -inf
    %399 = vmax.xlane.f32.xlu0 %v398
    %v400 = vpop.xlane.xlu0 %399
    %v401 = vsel %vm361, %v353, -inf
    %402 = vmax.xlane.f32.xlu0 %v401
    %v403 = vpop.xlane.xlu0 %402
    %v404 = vsel %vm361, %v356, -inf
    %405 = vmax.xlane.f32.xlu0 %v404
    %v406 = vpop.xlane.xlu0 %405
    %v407 = vsel %vm361, %v359, -inf
    %408 = vmax.xlane.f32.xlu0 %v407
    %v409 = vpop.xlane.xlu0 %408
    %v410 = vsub.f32 %v241, %v364
    %v411 = vsub.f32 %v244, %v367
    %v412 = vsub.f32 %v247, %v370
    %v413 = vsub.f32 %v250, %v373
    %v414 = vsub.f32 %v253, %v376
    %v415 = vsub.f32 %v256, %v379
    %v416 = vsub.f32 %v259, %v382
    %v417 = vsub.f32 %v262, %v385
    %v418 = vsub.f32 %v338, %v388
    %v419 = vsub.f32 %v341, %v391
    %v420 = vsub.f32 %v344, %v394
    %v421 = vsub.f32 %v347, %v397
    %v422 = vsub.f32 %v350, %v400
    %v423 = vsub.f32 %v353, %v403
    %v424 = vsub.f32 %v356, %v406
    %v425 = vsub.f32 %v359, %v409
    %v426 = vmul.f32 %v410, 1.442695
    %v427 = vpow.pop %v426
    %v428 = vmul.f32 %v411, 1.442695
    %v429 = vpow.pop %v428
    %v430 = vmul.f32 %v412, 1.442695
    %v431 = vpow.pop %v430
    %v432 = vmul.f32 %v413, 1.442695
    %v433 = vpow.pop %v432
    %v434 = vmul.f32 %v414, 1.442695
    %v435 = vpow.pop %v434
    %v436 = vmul.f32 %v415, 1.442695
    %v437 = vpow.pop %v436
    %v438 = vmul.f32 %v416, 1.442695
    %v439 = vpow.pop %v438
    %v440 = vmul.f32 %v417, 1.442695
    %v441 = vpow.pop %v440
    %v442 = vmul.f32 %v418, 1.442695
    %v443 = vpow.pop %v442
    %v444 = vmul.f32 %v419, 1.442695
    %v445 = vpow.pop %v444
    %v446 = vmul.f32 %v420, 1.442695
    %v447 = vpow.pop %v446
    %v448 = vmul.f32 %v421, 1.442695
    %v449 = vpow.pop %v448
    %v450 = vmul.f32 %v422, 1.442695
    %v451 = vpow.pop %v450
    %v452 = vmul.f32 %v423, 1.442695
    %v453 = vpow.pop %v452
    %v454 = vmul.f32 %v424, 1.442695
    %v455 = vpow.pop %v454
    %v456 = vmul.f32 %v425, 1.442695
    %v457 = vpow.pop %v456
    %v458 = vsel %vm361, %v427, 0.0
    %459 = vadd.xlane.f32.xlu0 %v458
    %v460 = vpop.xlane.xlu0 %459
    %v461 = vsel %vm361, %v429, 0.0
    %462 = vadd.xlane.f32.xlu0 %v461
    %v463 = vpop.xlane.xlu0 %462
    %v464 = vsel %vm361, %v431, 0.0
    %465 = vadd.xlane.f32.xlu0 %v464
    %v466 = vpop.xlane.xlu0 %465
    %v467 = vsel %vm361, %v433, 0.0
    %468 = vadd.xlane.f32.xlu0 %v467
    %v469 = vpop.xlane.xlu0 %468
    %v470 = vsel %vm361, %v435, 0.0
    %471 = vadd.xlane.f32.xlu0 %v470
    %v472 = vpop.xlane.xlu0 %471
    %v473 = vsel %vm361, %v437, 0.0
    %474 = vadd.xlane.f32.xlu0 %v473
    %v475 = vpop.xlane.xlu0 %474
    %v476 = vsel %vm361, %v439, 0.0
    %477 = vadd.xlane.f32.xlu0 %v476
    %v478 = vpop.xlane.xlu0 %477
    %v479 = vsel %vm361, %v441, 0.0
    %480 = vadd.xlane.f32.xlu0 %v479
    %v481 = vpop.xlane.xlu0 %480
    %v482 = vsel %vm361, %v443, 0.0
    %483 = vadd.xlane.f32.xlu0 %v482
    %v484 = vpop.xlane.xlu0 %483
    %v485 = vsel %vm361, %v445, 0.0
    %486 = vadd.xlane.f32.xlu0 %v485
    %v487 = vpop.xlane.xlu0 %486
    %v488 = vsel %vm361, %v447, 0.0
    %489 = vadd.xlane.f32.xlu0 %v488
    %v490 = vpop.xlane.xlu0 %489
    %v491 = vsel %vm361, %v449, 0.0
    %492 = vadd.xlane.f32.xlu0 %v491
    %v493 = vpop.xlane.xlu0 %492
    %v494 = vsel %vm361, %v451, 0.0
    %495 = vadd.xlane.f32.xlu0 %v494
    %v496 = vpop.xlane.xlu0 %495
    %v497 = vsel %vm361, %v453, 0.0
    %498 = vadd.xlane.f32.xlu0 %v497
    %v499 = vpop.xlane.xlu0 %498
    %v500 = vsel %vm361, %v455, 0.0
    %501 = vadd.xlane.f32.xlu0 %v500
    %v502 = vpop.xlane.xlu0 %501
    %v503 = vsel %vm361, %v457, 0.0
    %504 = vadd.xlane.f32.xlu0 %v503
    %v505 = vpop.xlane.xlu0 %504
    %v506 = vrcp.pop %v460
    %v507 = vrcp.pop %v463
    %v508 = vrcp.pop %v466
    %v509 = vrcp.pop %v469
    %v510 = vrcp.pop %v472
    %v511 = vrcp.pop %v475
    %v512 = vrcp.pop %v478
    %v513 = vrcp.pop %v481
    %v514 = vrcp.pop %v484
    %v515 = vrcp.pop %v487
    %v516 = vrcp.pop %v490
    %v517 = vrcp.pop %v493
    %v518 = vrcp.pop %v496
    %v519 = vrcp.pop %v499
    %v520 = vrcp.pop %v502
    %v521 = vrcp.pop %v505
    %v522 = vmul.f32 %v427, %v506
    %v523 = vmul.f32 %v429, %v507
    %v524 = vmul.f32 %v431, %v508
    %v525 = vmul.f32 %v433, %v509
    %v526 = vmul.f32 %v435, %v510
    %v527 = vmul.f32 %v437, %v511
    %v528 = vmul.f32 %v439, %v512
    %v529 = vmul.f32 %v441, %v513
    %v530 = vmul.f32 %v443, %v514
    %v531 = vmul.f32 %v445, %v515
    %v532 = vmul.f32 %v447, %v516
    %v533 = vmul.f32 %v449, %v517
    %v534 = vmul.f32 %v451, %v518
    %v535 = vmul.f32 %v453, %v519
    %v536 = vmul.f32 %v455, %v520
    %v537 = vmul.f32 %v457, %v521
    %538 = vrot.lane.b32.xlu0 %v119, 120
    %v539 = vpop.permute.xlu0 %538
    %540 = vrot.lane.b32.xlu0 %v122, 120
    %v541 = vpop.permute.xlu0 %540
    %542 = vrot.lane.b32.xlu0 %v125, 120
    %v543 = vpop.permute.xlu0 %542
    %544 = vrot.lane.b32.xlu0 %v128, 120
    %v545 = vpop.permute.xlu0 %544
    %546 = vrot.lane.b32.xlu0 %v131, 120
    %v547 = vpop.permute.xlu0 %546
    %548 = vrot.lane.b32.xlu0 %v134, 120
    %v549 = vpop.permute.xlu0 %548
    %550 = vrot.lane.b32.xlu0 %v137, 120
    %v551 = vpop.permute.xlu0 %550
    %552 = vrot.lane.b32.xlu0 %v140, 120
    %v553 = vpop.permute.xlu0 %552
    %v563 = vsel %vm361, %v522, 0
    %v566 = vsel %vm361, %v523, 0
    %v569 = vsel %vm361, %v524, 0
    %v572 = vsel %vm361, %v525, 0
    %v575 = vsel %vm361, %v526, 0
    %v578 = vsel %vm361, %v527, 0
    %v581 = vsel %vm361, %v528, 0
    %v584 = vsel %vm361, %v529, 0
    %586 = vmatpush.msra.mxu0 0.0
    %587 = vmatpush.msra.mxu0 0.0
    %588 = vmatpush.msra.mxu0 0.0
    %589 = vmatpush.msra.mxu0 0.0
    %590 = vmatpush.msra.mxu0 0.0
    %591 = vmatpush.msra.mxu0 0.0
    %592 = vmatpush.msra.mxu0 0.0
    %593 = vmatpush.msra.mxu0 0.0
    %594 = vmatpush.msra.mxu0 %v553
    %595 = vmatpush.msra.mxu0 %v551
    %596 = vmatpush.msra.mxu0 %v549
    %597 = vmatpush.msra.mxu0 %v547
    %598 = vmatpush.msra.mxu0 %v545
    %599 = vmatpush.msra.mxu0 %v543
    %600 = vmatpush.msra.mxu0 %v541
    %601 = vmatpush.msra.mxu0 %v539
    %602 = vmatmul.f32.gmra.mxu0 %v563
    %v603 = vpop.f32.mrf.mxu0
    %v604 = vadd.f32 0.0, %v603
    %605 = vmatmul.f32.gmra.mxu0 %v566
    %v606 = vpop.f32.mrf.mxu0
    %v607 = vadd.f32 0.0, %v606
    %608 = vmatmul.f32.gmra.mxu0 %v569
    %v609 = vpop.f32.mrf.mxu0
    %v610 = vadd.f32 0.0, %v609
    %611 = vmatmul.f32.gmra.mxu0 %v572
    %v612 = vpop.f32.mrf.mxu0
    %v613 = vadd.f32 0.0, %v612
    %614 = vmatmul.f32.gmra.mxu0 %v575
    %v615 = vpop.f32.mrf.mxu0
    %v616 = vadd.f32 0.0, %v615
    %617 = vmatmul.f32.gmra.mxu0 %v578
    %v618 = vpop.f32.mrf.mxu0
    %v619 = vadd.f32 0.0, %v618
    %620 = vmatmul.f32.gmra.mxu0 %v581
    %v621 = vpop.f32.mrf.mxu0
    %v622 = vadd.f32 0.0, %v621
    %623 = vmatmul.f32.gmra.mxu0 %v584
    %v624 = vpop.f32.mrf.mxu0
    %v625 = vadd.f32 0.0, %v624
    %626 = vdwg.mxu0
    %627 = vrot.lane.b32.xlu0 %v143, 120
    %v628 = vpop.permute.xlu0 %627
    %629 = vrot.lane.b32.xlu0 %v146, 120
    %v630 = vpop.permute.xlu0 %629
    %631 = vrot.lane.b32.xlu0 %v149, 120
    %v632 = vpop.permute.xlu0 %631
    %633 = vrot.lane.b32.xlu0 %v152, 120
    %v634 = vpop.permute.xlu0 %633
    %635 = vrot.lane.b32.xlu0 %v155, 120
    %v636 = vpop.permute.xlu0 %635
    %637 = vrot.lane.b32.xlu0 %v158, 120
    %v638 = vpop.permute.xlu0 %637
    %639 = vrot.lane.b32.xlu0 %v161, 120
    %v640 = vpop.permute.xlu0 %639
    %641 = vrot.lane.b32.xlu0 %v164, 120
    %v642 = vpop.permute.xlu0 %641
    %v652 = vsel %vm361, %v530, 0
    %v655 = vsel %vm361, %v531, 0
    %v658 = vsel %vm361, %v532, 0
    %v661 = vsel %vm361, %v533, 0
    %v664 = vsel %vm361, %v534, 0
    %v667 = vsel %vm361, %v535, 0
    %v670 = vsel %vm361, %v536, 0
    %v673 = vsel %vm361, %v537, 0
    %675 = vmatpush.msra.mxu0 0.0
    %676 = vmatpush.msra.mxu0 0.0
    %677 = vmatpush.msra.mxu0 0.0
    %678 = vmatpush.msra.mxu0 0.0
    %679 = vmatpush.msra.mxu0 0.0
    %680 = vmatpush.msra.mxu0 0.0
    %681 = vmatpush.msra.mxu0 0.0
    %682 = vmatpush.msra.mxu0 0.0
    %683 = vmatpush.msra.mxu0 %v642
    %684 = vmatpush.msra.mxu0 %v640
    %685 = vmatpush.msra.mxu0 %v638
    %686 = vmatpush.msra.mxu0 %v636
    %687 = vmatpush.msra.mxu0 %v634
    %688 = vmatpush.msra.mxu0 %v632
    %689 = vmatpush.msra.mxu0 %v630
    %690 = vmatpush.msra.mxu0 %v628
    %691 = vmatmul.f32.gmra.mxu0 %v652
    %v692 = vpop.f32.mrf.mxu0
    %v693 = vadd.f32 0.0, %v692
    %694 = vmatmul.f32.gmra.mxu0 %v655
    %v695 = vpop.f32.mrf.mxu0
    %v696 = vadd.f32 0.0, %v695
    %697 = vmatmul.f32.gmra.mxu0 %v658
    %v698 = vpop.f32.mrf.mxu0
    %v699 = vadd.f32 0.0, %v698
    %700 = vmatmul.f32.gmra.mxu0 %v661
    %v701 = vpop.f32.mrf.mxu0
    %v702 = vadd.f32 0.0, %v701
    %703 = vmatmul.f32.gmra.mxu0 %v664
    %v704 = vpop.f32.mrf.mxu0
    %v705 = vadd.f32 0.0, %v704
    %706 = vmatmul.f32.gmra.mxu0 %v667
    %v707 = vpop.f32.mrf.mxu0
    %v708 = vadd.f32 0.0, %v707
    %709 = vmatmul.f32.gmra.mxu0 %v670
    %v710 = vpop.f32.mrf.mxu0
    %v711 = vadd.f32 0.0, %v710
    %712 = vmatmul.f32.gmra.mxu0 %v673
    %v713 = vpop.f32.mrf.mxu0
    %v714 = vadd.f32 0.0, %v713
    %715 = vdwg.mxu0
    %s716 = sld [smem:[#allocation2]]
    %v717 = vstv %s716
    %v718 = vmul.f32 %v717, %v604
    %v719 = vmul.f32 %v717, %v607
    %v720 = vmul.f32 %v717, %v610
    %v721 = vmul.f32 %v717, %v613
    %v722 = vmul.f32 %v717, %v616
    %v723 = vmul.f32 %v717, %v619
    %v724 = vmul.f32 %v717, %v622
    %v725 = vmul.f32 %v717, %v625
    %v726 = vmul.f32 %v717, %v693
    %v727 = vmul.f32 %v717, %v696
    %v728 = vmul.f32 %v717, %v699
    %v729 = vmul.f32 %v717, %v702
    %v730 = vmul.f32 %v717, %v705
    %v731 = vmul.f32 %v717, %v708
    %v732 = vmul.f32 %v717, %v711
    %v733 = vmul.f32 %v717, %v714
    %v734 = vadd.f32 %v718, %v28
    %v735 = vadd.f32 %v719, %v29
    %v736 = vadd.f32 %v720, %v30
    %v737 = vadd.f32 %v721, %v31
    %v738 = vadd.f32 %v722, %v32
    %v739 = vadd.f32 %v723, %v33
    %v740 = vadd.f32 %v724, %v34
    %v741 = vadd.f32 %v725, %v35
    %v742 = vadd.f32 %v726, %v36
    %v743 = vadd.f32 %v727, %v37
    %v744 = vadd.f32 %v728, %v38
    %v745 = vadd.f32 %v729, %v39
    %v746 = vadd.f32 %v730, %v40
    %v747 = vadd.f32 %v731, %v41
    %v748 = vadd.f32 %v732, %v42
    %v749 = vadd.f32 %v733, %v43
    %v750 = vld [vmem:[%s4] sm:$0xff]
    %v751 = vld [vmem:[%s4 + $0x8] sm:$0xff]
    %v752 = vld [vmem:[%s4 + $0x10] sm:$0xff]
    %v753 = vld [vmem:[%s4 + $0x18] sm:$0xff]
    %v754 = vld [vmem:[%s4 + $0x20] sm:$0xff]
    %v755 = vld [vmem:[%s4 + $0x28] sm:$0xff]
    %v756 = vld [vmem:[%s4 + $0x30] sm:$0xff]
    %v757 = vld [vmem:[%s4 + $0x38] sm:$0xff]
    %v758 = vld [vmem:[%s4 + $0x40] sm:$0xff]
    %v759 = vld [vmem:[%s4 + $0x48] sm:$0xff]
    %v760 = vld [vmem:[%s4 + $0x50] sm:$0xff]
    %v761 = vld [vmem:[%s4 + $0x58] sm:$0xff]
    %v762 = vld [vmem:[%s4 + $0x60] sm:$0xf]
    %v763 = vld [vmem:[%s5] sm:$0xff]
    %v764 = vld [vmem:[%s5 + $0x8] sm:$0xff]
    %v765 = vld [vmem:[%s5 + $0x10] sm:$0xff]
    %v766 = vld [vmem:[%s5 + $0x18] sm:$0xff]
    %v767 = vld [vmem:[%s5 + $0x20] sm:$0xff]
    %v768 = vld [vmem:[%s5 + $0x28] sm:$0xff]
    %v769 = vld [vmem:[%s5 + $0x30] sm:$0xff]
    %v770 = vld [vmem:[%s5 + $0x38] sm:$0xff]
    %v771 = vld [vmem:[%s5 + $0x40] sm:$0xff]
    %v772 = vld [vmem:[%s5 + $0x48] sm:$0xff]
    %v773 = vld [vmem:[%s5 + $0x50] sm:$0xff]
    %v774 = vld [vmem:[%s5 + $0x58] sm:$0xff]
    %v775 = vld [vmem:[%s5 + $0x60] sm:$0xf]
    %777 = vset.pattern.permute.xlu0 0
    %778 = vperm.xlu0 %777, %v763
    %v779 = vpop.permute.xlu0 %778
    %782 = vset.pattern.permute.xlu0 0
    %783 = vperm.xlu0 %782, %v764
    %v784 = vpop.permute.xlu0 %783
    %787 = vset.pattern.permute.xlu0 0
    %788 = vperm.xlu0 %787, %v765
    %v789 = vpop.permute.xlu0 %788
    %792 = vset.pattern.permute.xlu0 0
    %793 = vperm.xlu0 %792, %v766
    %v794 = vpop.permute.xlu0 %793
    %797 = vset.pattern.permute.xlu0 0
    %798 = vperm.xlu0 %797, %v767
    %v799 = vpop.permute.xlu0 %798
    %802 = vset.pattern.permute.xlu0 0
    %803 = vperm.xlu0 %802, %v768
    %v804 = vpop.permute.xlu0 %803
    %807 = vset.pattern.permute.xlu0 0
    %808 = vperm.xlu0 %807, %v769
    %v809 = vpop.permute.xlu0 %808
    %812 = vset.pattern.permute.xlu0 0
    %813 = vperm.xlu0 %812, %v770
    %v814 = vpop.permute.xlu0 %813
    %817 = vset.pattern.permute.xlu0 0
    %818 = vperm.xlu0 %817, %v771
    %v819 = vpop.permute.xlu0 %818
    %822 = vset.pattern.permute.xlu0 0
    %823 = vperm.xlu0 %822, %v772
    %v824 = vpop.permute.xlu0 %823
    %827 = vset.pattern.permute.xlu0 0
    %828 = vperm.xlu0 %827, %v773
    %v829 = vpop.permute.xlu0 %828
    %832 = vset.pattern.permute.xlu0 0
    %833 = vperm.xlu0 %832, %v774
    %v834 = vpop.permute.xlu0 %833
    %837 = vset.pattern.permute.xlu0 0
    %838 = vperm.xlu0 %837, %v775
    %v839 = vpop.permute.xlu0 %838
    %v842 = vsel %vm52, %v750, 0
    %v845 = vsel %vm52, %v751, 0
    %v848 = vsel %vm52, %v752, 0
    %v851 = vsel %vm52, %v753, 0
    %v854 = vsel %vm52, %v754, 0
    %v857 = vsel %vm52, %v755, 0
    %v860 = vsel %vm52, %v756, 0
    %v863 = vsel %vm52, %v757, 0
    %v866 = vsel %vm52, %v758, 0
    %v869 = vsel %vm52, %v759, 0
    %v872 = vsel %vm52, %v760, 0
    %v875 = vsel %vm52, %v761, 0
    %v878 = vsel %vm52, %v762, 0
    %v881 = vsel %vm52, %v734, 0
    %v884 = vsel %vm52, %v735, 0
    %v887 = vsel %vm52, %v736, 0
    %v890 = vsel %vm52, %v737, 0
    %v893 = vsel %vm52, %v738, 0
    %v896 = vsel %vm52, %v739, 0
    %v899 = vsel %vm52, %v740, 0
    %v902 = vsel %vm52, %v741, 0
    %v905 = vsel %vm52, %v742, 0
    %v908 = vsel %vm52, %v743, 0
    %v911 = vsel %vm52, %v744, 0
    %v914 = vsel %vm52, %v745, 0
    %v917 = vsel %vm52, %v746, 0
    %v920 = vsel %vm52, %v747, 0
    %v923 = vsel %vm52, %v748, 0
    %v926 = vsel %vm52, %v749, 0
    %928 = vmatpush.xpose.msra.mxu0 %v926
    %929 = vmatpush.xpose.msra.mxu0 %v923
    %930 = vmatpush.xpose.msra.mxu0 %v920
    %931 = vmatpush.xpose.msra.mxu0 %v917
    %932 = vmatpush.xpose.msra.mxu0 %v914
    %933 = vmatpush.xpose.msra.mxu0 %v911
    %934 = vmatpush.xpose.msra.mxu0 %v908
    %935 = vmatpush.xpose.msra.mxu0 %v905
    %936 = vmatpush.xpose.msra.mxu0 %v902
    %937 = vmatpush.xpose.msra.mxu0 %v899
    %938 = vmatpush.xpose.msra.mxu0 %v896
    %939 = vmatpush.xpose.msra.mxu0 %v893
    %940 = vmatpush.xpose.msra.mxu0 %v890
    %941 = vmatpush.xpose.msra.mxu0 %v887
    %942 = vmatpush.xpose.msra.mxu0 %v884
    %943 = vmatpush.xpose.msra.mxu0 %v881
    %944 = vmatmul.f32.gmra.mxu0 %v842
    %v945 = vpop.f32.mrf.mxu0
    %v946 = vadd.f32 %v779, %v945
    %947 = vmatmul.f32.gmra.mxu0 %v845
    %v948 = vpop.f32.mrf.mxu0
    %v949 = vadd.f32 %v784, %v948
    %950 = vmatmul.f32.gmra.mxu0 %v848
    %v951 = vpop.f32.mrf.mxu0
    %v952 = vadd.f32 %v789, %v951
    %953 = vmatmul.f32.gmra.mxu0 %v851
    %v954 = vpop.f32.mrf.mxu0
    %v955 = vadd.f32 %v794, %v954
    %956 = vmatmul.f32.gmra.mxu0 %v854
    %v957 = vpop.f32.mrf.mxu0
    %v958 = vadd.f32 %v799, %v957
    %959 = vmatmul.f32.gmra.mxu0 %v857
    %v960 = vpop.f32.mrf.mxu0
    %v961 = vadd.f32 %v804, %v960
    %962 = vmatmul.f32.gmra.mxu0 %v860
    %v963 = vpop.f32.mrf.mxu0
    %v964 = vadd.f32 %v809, %v963
    %965 = vmatmul.f32.gmra.mxu0 %v863
    %v966 = vpop.f32.mrf.mxu0
    %v967 = vadd.f32 %v814, %v966
    %968 = vmatmul.f32.gmra.mxu0 %v866
    %v969 = vpop.f32.mrf.mxu0
    %v970 = vadd.f32 %v819, %v969
    %971 = vmatmul.f32.gmra.mxu0 %v869
    %v972 = vpop.f32.mrf.mxu0
    %v973 = vadd.f32 %v824, %v972
    %974 = vmatmul.f32.gmra.mxu0 %v872
    %v975 = vpop.f32.mrf.mxu0
    %v976 = vadd.f32 %v829, %v975
    %977 = vmatmul.f32.gmra.mxu0 %v875
    %v978 = vpop.f32.mrf.mxu0
    %v979 = vadd.f32 %v834, %v978
    %980 = vmatmul.f32.gmra.mxu0 %v878
    %v981 = vpop.f32.mrf.mxu0
    %v982 = vadd.f32 %v839, %v981
    %983 = vdwg.mxu0
    %v984 = vtanh.pop %v946
    %v985 = vtanh.pop %v949
    %v986 = vtanh.pop %v952
    %v987 = vtanh.pop %v955
    %v988 = vtanh.pop %v958
    %v989 = vtanh.pop %v961
    %v990 = vtanh.pop %v964
    %v991 = vtanh.pop %v967
    %v992 = vtanh.pop %v970
    %v993 = vtanh.pop %v973
    %v994 = vtanh.pop %v976
    %v995 = vtanh.pop %v979
    %v996 = vtanh.pop %v982
    %v997 = vld [vmem:[%s6] sm:$0x1]
    %vm998 = vcmask 818176
    %v1000 = vsel %vm998, %v997, 0
    %vm1002 = vcmask 1043456
    %v1004 = vsel %vm1002, %v996, 0
    %1006 = vmatpush.msra.mxu0 0.0
    %1007 = vmatpush.msra.mxu0 0.0
    %1008 = vmatpush.msra.mxu0 0.0
    %1009 = vmatpush.msra.mxu0 %v1004
    %1010 = vmatpush.msra.mxu0 %v995
    %1011 = vmatpush.msra.mxu0 %v994
    %1012 = vmatpush.msra.mxu0 %v993
    %1013 = vmatpush.msra.mxu0 %v992
    %1014 = vmatpush.msra.mxu0 %v991
    %1015 = vmatpush.msra.mxu0 %v990
    %1016 = vmatpush.msra.mxu0 %v989
    %1017 = vmatpush.msra.mxu0 %v988
    %1018 = vmatpush.msra.mxu0 %v987
    %1019 = vmatpush.msra.mxu0 %v986
    %1020 = vmatpush.msra.mxu0 %v985
    %1021 = vmatpush.msra.mxu0 %v984
    %1022 = vmatmul.f32.gmra.mxu0 %v1000
    %v1023 = vpop.f32.mrf.mxu0
    %v1024 = vadd.f32 0.0, %v1023
    %1025 = vdwg.mxu0
    %vm1026 = vcmask 516096
    %v1027 = vsel %vm1026, %v1024, -inf
    %1028 = vmax.xlane.f32.xlu0 %v1027
    %v1029 = vpop.xlane.xlu0 %1028
    %v1030 = vsub.f32 %v1024, %v1029
    %v1031 = vmul.f32 %v1030, 1.442695
    %v1032 = vpow.pop %v1031
    %v1033 = vsel %vm1026, %v1032, 0.0
    %1034 = vadd.xlane.f32.xlu0 %v1033
    %v1035 = vpop.xlane.xlu0 %1034
    %v1036 = vrcp.pop %v1035
    %v1037 = vmul.f32 %v1032, %v1036
    %v1039 = vsel %vm361, %v1037, 0
    %1041 = vmatpush.msra.mxu0 0.0
    %1042 = vmatpush.msra.mxu0 0.0
    %1043 = vmatpush.msra.mxu0 0.0
    %1044 = vmatpush.msra.mxu0 0.0
    %1045 = vmatpush.msra.mxu0 0.0
    %1046 = vmatpush.msra.mxu0 0.0
    %1047 = vmatpush.msra.mxu0 0.0
    %1048 = vmatpush.msra.mxu0 0.0
    %1049 = vmatpush.msra.mxu0 %v35
    %1050 = vmatpush.msra.mxu0 %v34
    %1051 = vmatpush.msra.mxu0 %v33
    %1052 = vmatpush.msra.mxu0 %v32
    %1053 = vmatpush.msra.mxu0 %v31
    %1054 = vmatpush.msra.mxu0 %v30
    %1055 = vmatpush.msra.mxu0 %v29
    %1056 = vmatpush.msra.mxu0 %v28
    %1057 = vmatmul.f32.gmra.mxu0 %v1039
    %v1058 = vpop.f32.mrf.mxu0
    %v1059 = vadd.f32 0.0, %v1058
    %1060 = vdwg.mxu0
    %vm1061 = vcmask 1040896
    %v1062 = vsel %vm1061, %v1024, -inf
    %1063 = vmax.xlane.f32.xlu0 %v1062
    %v1064 = vpop.xlane.xlu0 %1063
    %v1065 = vsub.f32 %v1024, %v1064
    %v1066 = vmul.f32 %v1065, 1.442695
    %v1067 = vpow.pop %v1066
    %1069 = vrot.lane.b32.xlu0 %v1067, 64
    %v1070 = vpop.permute.xlu0 %1069
    %v1072 = vsel %vm1026, %v1070, 0.0
    %1073 = vadd.xlane.f32.xlu0 %v1072
    %v1074 = vpop.xlane.xlu0 %1073
    %v1075 = vrcp.pop %v1074
    %v1076 = vmul.f32 %v1067, %v1075
    %1078 = vrot.lane.b32.xlu0 %v1076, 64
    %v1079 = vpop.permute.xlu0 %1078
    %v1080 = vsel %vm361, %v1079, 0
    %1082 = vmatpush.msra.mxu0 0.0
    %1083 = vmatpush.msra.mxu0 0.0
    %1084 = vmatpush.msra.mxu0 0.0
    %1085 = vmatpush.msra.mxu0 0.0
    %1086 = vmatpush.msra.mxu0 0.0
    %1087 = vmatpush.msra.mxu0 0.0
    %1088 = vmatpush.msra.mxu0 0.0
    %1089 = vmatpush.msra.mxu0 0.0
    %1090 = vmatpush.msra.mxu0 %v43
    %1091 = vmatpush.msra.mxu0 %v42
    %1092 = vmatpush.msra.mxu0 %v41
    %1093 = vmatpush.msra.mxu0 %v40
    %1094 = vmatpush.msra.mxu0 %v39
    %1095 = vmatpush.msra.mxu0 %v38
    %1096 = vmatpush.msra.mxu0 %v37
    %1097 = vmatpush.msra.mxu0 %v36
    %1098 = vmatmul.f32.gmra.mxu0 %v1080
    %v1099 = vpop.f32.mrf.mxu0
    %v1100 = vadd.f32 0.0, %v1099
    %1101 = vdwg.mxu0
    %v1103 = vrot.slane %v1100, 7
    %vm1105 = vcmask 1040384
    %v1106 = vsel %vm1105, %v1059, %v1103
    %vm1107 = vcmask 254976
    %1108 = vst.msk [vmem:[#allocation3] sm:$0x3] %vm1107, %v1106
    // Predicated region
    $region30: #{tpu_custom_call.1} parent=1 // pred_check
      _
    $region31: #{tpu_custom_call.1} parent=1 // pred_check_branch
      %1110 = sbr.rel (0) target = $region33
    $region32: #{tpu_custom_call.1} parent=1 // pred_region
      %1112 = vsyncadd [#allocation4], 0
      %s1114 = sshll.u32 [#allocation3], 4
      %s1115 = int_to_ptr.vmem [resolvable:$true] %s1114
      %s1116 = sshll.u32 %s7, 4
      %s1117 = int_to_ptr.hbm [resolvable:$true] %s1116
      %1119 = dma.vmem_to_hbm [thread:$0]  %s1115, 32, %s1117, [#allocation4]
    $region33: #{tpu_custom_call.1} parent=1 // pred_fallthru
      _
    // Predicated region
    $region34: #{tpu_custom_call.1} parent=1 // pred_check
      _
    $region35: #{tpu_custom_call.1} parent=1 // pred_check_branch
      %1121 = sbr.rel (0) target = $region37
    $region36: #{tpu_custom_call.1} parent=1 // pred_region
      %1123 = dma.done [#allocation4], 32
    $region37: #{tpu_custom_call.1} parent=1 // pred_fallthru
      _
    %1124 = vsyncpa [#allocation4], 1

</llo_original>
